<compile_context>
chip_gen: v7x
topology: tpu7x:2x2x1
jax: 0.10.0
libtpu: 0.0.40
codegen_flags: <defaults>
</compile_context>

<pallas_src>
import jax
import jax.numpy as jnp
from jax import lax
from jax.experimental import pallas as pl
from jax.experimental.pallas import tpu as pltpu


def _pmca_fused_kernel(x_ref, wvec_ref, w1_ref, w2_ref, alpha_ref, o_ref):
    """One grid step = `nb` whole batches.

    x_ref   : (nb*C, HWp) lane-dense rows, one row per (batch, channel)
    wvec_ref: (C, HWp)    per-channel pooled-statistics weights (resident)
    w1_ref  : (Cr, C)     SE fc1 weight (PyTorch orientation, resident)
    w2_ref  : (C, Cr)     SE fc2 weight (resident)
    alpha_ref: (1, 1)     PReLU slope in SMEM
    o_ref   : (nb*C, HWp) gated output
    """
    C = wvec_ref.shape[0]
    nb = x_ref.shape[0] // C

    wvec = wvec_ref[...]
    w1 = w1_ref[...]
    w2 = w2_ref[...]
    alpha = alpha_ref[0, 0]

    def per_batch(b, carry):
        start = pl.multiple_of(b * C, C)
        xb = x_ref[pl.ds(start, C), :].astype(jnp.float32)            # (C, HWp)

        # o1 + o2 folded into one weighted lane reduce (VPU mul + XLU reduce).
        o_sum = jnp.sum(xb * wvec, axis=-1, keepdims=True)            # (C, 1)

        # SE block on the column vector: (Cr,C)@(C,1) -> PReLU -> (C,Cr)@(Cr,1)
        # -> sigmoid.  No transposes/reshapes; FLOPs negligible.
        h = jnp.dot(w1, o_sum, preferred_element_type=jnp.float32)    # (Cr, 1)
        h = jnp.where(h >= 0, h, alpha * h)
        z = jnp.dot(w2, h, preferred_element_type=jnp.float32)        # (C, 1)
        gate = jax.nn.sigmoid(z)                                      # (C, 1)

        # Apply: broadcast gate along the lane (H*W) axis, lane-dense store.
        o_ref[pl.ds(start, C), :] = (gate * xb).astype(o_ref.dtype)
        return carry

    lax.fori_loop(0, nb, per_batch, 0, unroll=(nb <= 8))


def _batches_per_block(B, C, HWp, itemsize, target_bytes=2 << 20, max_nb=32):
    """Whole batches per grid step sized by bytes (~2 MiB of x), dividing B."""
    per_batch = max(C * HWp * itemsize, 1)
    nb = int(max(1, min(B, max_nb, target_bytes // per_batch)))
    while B % nb != 0:
        nb -= 1
    # BlockSpec row dim must be a multiple of 8 or span the full array.
    if (nb * C) % 8 != 0 and nb != B:
        nb = B
    return nb


def pmca_forward(x, dw, w1, w2, alpha):
    """x: (B,C,H,W); dw: (C,4) flattened 2x2 depthwise weights in (kh,kw) order;
       w1: (C//r, C); w2: (C, C//r); alpha: (1,1) PReLU slope."""
    B, C, H, W = x.shape
    assert H % 2 == 0 and W % 2 == 0, "adaptive (2,2) pooling reproduced for even H, W"
    # TODO(synk): odd H/W would need the general AdaptiveAvgPool2d bin boundaries.
    HW = H * W
    H2, W2 = H // 2, W // 2
    HWp = ((HW + 127) // 128) * 128          # lane-dense spatial axis
    Cr = w1.shape[0]

    # Per-channel pooled-statistics weights:
    #   o1 + o2 = sum_hw x[b,c,hw] * (dw[c, quad(hw)]/(H2*W2) + 1/(H*W))
    hh = (jnp.arange(H)[:, None] >= H2).astype(jnp.int32)
    ww = (jnp.arange(W)[None, :] >= W2).astype(jnp.int32)
    kq = (hh * 2 + ww).reshape(-1)                                    # (HW,) in {0..3}
    wvec = dw[:, kq].astype(jnp.float32) * (1.0 / (H2 * W2)) + (1.0 / HW)  # (C, HW)

    # Lane-dense 2-D views, padded to a multiple of 128 lanes if needed.
    x2 = x.reshape(B * C, HW)
    if HWp != HW:
        x2 = jnp.pad(x2, ((0, 0), (0, HWp - HW)))
        wvec = jnp.pad(wvec, ((0, 0), (0, HWp - HW)))   # zeros keep the reduce exact

    nb = _batches_per_block(B, C, HWp, x2.dtype.itemsize)
    rows_per_block = nb * C
    grid = (B // nb,)

    # VMEM budget: double-buffered x + out blocks, resident consts, slack.
    block_bytes = rows_per_block * HWp * x2.dtype.itemsize
    vmem_limit = int(min(max(4 * block_bytes + 4 * C * HWp * 4 + (4 << 20), 16 << 20),
                         48 << 20))

    out2 = pl.pallas_call(
        _pmca_fused_kernel,
        out_shape=jax.ShapeDtypeStruct((B * C, HWp), x.dtype),
        grid=grid,
        in_specs=[
            pl.BlockSpec((rows_per_block, HWp), lambda i: (i, 0)),    # x (streamed)
            pl.BlockSpec((C, HWp), lambda i: (0, 0)),                 # wvec (resident)
            pl.BlockSpec((Cr, C), lambda i: (0, 0)),                  # w1 (resident)
            pl.BlockSpec((C, Cr), lambda i: (0, 0)),                  # w2 (resident)
            pl.BlockSpec(memory_space=pltpu.MemorySpace.SMEM),        # alpha (1,1)
        ],
        out_specs=pl.BlockSpec((rows_per_block, HWp), lambda i: (i, 0)),
        compiler_params=pltpu.CompilerParams(
            dimension_semantics=("parallel",),
            vmem_limit_bytes=vmem_limit),
        # NOTE: input_output_aliases={0: 0} would halve peak HBM footprint but
        # only helps if the caller donates x; left off for safety here.
    )(x2, wvec.astype(jnp.float32), w1.astype(jnp.float32),
      w2.astype(jnp.float32), alpha.astype(jnp.float32))

    if HWp != HW:
        out2 = out2[:, :HW]
    return out2.reshape(B, C, H, W)


def pmca_reference(x, dw, w1, w2, alpha):
    """Pure-JAX reference of the PyTorch forward for correctness checking."""
    B, C, H, W = x.shape
    H2, W2 = H // 2, W // 2
    q = jnp.stack([
        jnp.mean(x[:, :, :H2, :W2], axis=(2, 3)),
        jnp.mean(x[:, :, :H2, W2:], axis=(2, 3)),
        jnp.mean(x[:, :, H2:, :W2], axis=(2, 3)),
        jnp.mean(x[:, :, H2:, W2:], axis=(2, 3)),
    ], axis=-1)                                            # (B, C, 4)
    o1 = jnp.sum(q * dw[None], axis=-1)                    # (B, C)
    o2 = jnp.mean(x, axis=(2, 3))                          # (B, C)
    s = o1 + o2
    h = s @ w1.T
    h = jnp.where(h >= 0, h, alpha[0, 0] * h)
    gate = jax.nn.sigmoid(h @ w2.T)
    return gate[:, :, None, None] * x


if __name__ == "__main__":
    B, C, H, W = 2, 32, 16, 16
    reduction = 8
    Cr = C // reduction

    key = jax.random.PRNGKey(0)
    kx, kdw, kw1, kw2 = jax.random.split(key, 4)

    x = jax.random.normal(kx, (B, C, H, W), dtype=jnp.float32)

    # Parameters matching the PyTorch module shapes:
    #   conv2x2.weight: (C,1,2,2) depthwise -> flattened (C,4) in (kh,kw) order
    #   SE fc1.weight : (C//r, C);  SE fc2.weight: (C, C//r);  PReLU alpha = 0.25
    dw = (0.1 * jax.random.normal(kdw, (C, 2, 2), dtype=jnp.float32)).reshape(C, 4)
    w1 = 0.1 * jax.random.normal(kw1, (Cr, C), dtype=jnp.float32)
    w2 = 0.1 * jax.random.normal(kw2, (C, Cr), dtype=jnp.float32)
    alpha = jnp.full((1, 1), 0.25, dtype=jnp.float32)

    out = jax.block_until_ready(jax.jit(pmca_forward)(x, dw, w1, w2, alpha))
    ref = pmca_reference(x, dw, w1, w2, alpha)

    assert out.shape == (B, C, H, W)
    # Pooling + apply are exact f32 on the VPU/XLU; only the tiny SE matmuls go
    # through MXU bf16 passes, so a loose tolerance is ample.
    assert jnp.allclose(out, ref, rtol=2e-3, atol=2e-3), "mismatch vs reference"

    print("KERNEL_OK")
</pallas_src>

<mosaic_0001>
module attributes {stable_mosaic.version = 11 : i64} {
  func.func @_pmca_fused_kernel(%arg0: i32, %arg1: memref<64x256xf32, #tpu.memory_space<vmem>>, %arg2: memref<32x256xf32, #tpu.memory_space<vmem>>, %arg3: memref<4x32xf32, #tpu.memory_space<vmem>>, %arg4: memref<32x4xf32, #tpu.memory_space<vmem>>, %arg5: memref<1x1xf32, #tpu.memory_space<smem>>, %arg6: memref<64x256xf32, #tpu.memory_space<vmem>>) attributes {dimension_semantics = [#tpu.dimension_semantics<parallel>], iteration_bounds = array<i64: 1>, scalar_prefetch = 0 : i64, scratch_operands = 0 : i64, tpu.core_type = #tpu.core_type<tc>, window_params = [{transform_indices = @transform_0, window_bounds = array<i64: 64, 256>}, {pipeline_mode = #tpu.pipeline_mode<synchronous>, transform_indices = @transform_1, window_bounds = array<i64: 32, 256>}, {pipeline_mode = #tpu.pipeline_mode<synchronous>, transform_indices = @transform_2, window_bounds = array<i64: 4, 32>}, {pipeline_mode = #tpu.pipeline_mode<synchronous>, transform_indices = @transform_3, window_bounds = array<i64: 32, 4>}, {transform_indices = @transform_4, window_bounds = array<i64: 1, 1>}, {transform_indices = @transform_5, window_bounds = array<i64: 64, 256>}]} {
    %c0 = arith.constant 0 : index
    %c0_0 = arith.constant 0 : index
    %0 = vector.load %arg2[%c0, %c0_0] : memref<32x256xf32, #tpu.memory_space<vmem>>, vector<32x256xf32>
    %c0_1 = arith.constant 0 : index
    %c0_2 = arith.constant 0 : index
    %1 = vector.load %arg3[%c0_1, %c0_2] : memref<4x32xf32, #tpu.memory_space<vmem>>, vector<4x32xf32>
    %c0_3 = arith.constant 0 : index
    %c0_4 = arith.constant 0 : index
    %2 = vector.load %arg4[%c0_3, %c0_4] : memref<32x4xf32, #tpu.memory_space<vmem>>, vector<32x4xf32>
    %c0_5 = arith.constant 0 : index
    %c0_6 = arith.constant 0 : index
    %3 = memref.load %arg5[%c0_5, %c0_6] : memref<1x1xf32, #tpu.memory_space<smem>>
    %c0_i32 = arith.constant 0 : i32
    %c32_i32 = arith.constant 32 : i32
    %4 = arith.muli %c0_i32, %c32_i32 : i32
    %5 = tpu.assume_multiple %4, 32 : i32
    %6 = arith.index_cast %5 : i32 to index
    %c0_7 = arith.constant 0 : index
    %7 = vector.load %arg1[%6, %c0_7] : memref<64x256xf32, #tpu.memory_space<vmem>>, vector<32x256xf32>
    %8 = arith.mulf %7, %0 : vector<32x256xf32>
    %cst = arith.constant dense<0.000000e+00> : vector<32xf32>
    %9 = vector.multi_reduction <add>, %8, %cst [1] : vector<32x256xf32> to vector<32xf32>
    %10 = vector.shape_cast %9 : vector<32xf32> to vector<32x1xf32>
    %cst_8 = arith.constant dense<0.000000e+00> : vector<4x1xf32>
    %11 = tpu.matmul %1, %10, %cst_8 {dimension_numbers = #tpu.dot_dimension_numbers<[1], [0], [0], [1], [0, 0, 1, 1], [], []>} : vector<4x32xf32>, vector<32x1xf32>, vector<4x1xf32> -> vector<4x1xf32>
    %cst_9 = arith.constant 0.000000e+00 : f32
    %12 = vector.broadcast %cst_9 : f32 to vector<4x1xf32>
    %13 = arith.cmpf oge, %11, %12 : vector<4x1xf32>
    %14 = vector.broadcast %3 : f32 to vector<4x1xf32>
    %15 = arith.mulf %14, %11 : vector<4x1xf32>
    %16 = arith.select %13, %11, %15 : vector<4x1xi1>, vector<4x1xf32>
    %cst_10 = arith.constant dense<0.000000e+00> : vector<32x1xf32>
    %17 = tpu.matmul %2, %16, %cst_10 {dimension_numbers = #tpu.dot_dimension_numbers<[1], [0], [0], [1], [0, 0, 1, 1], [], []>} : vector<32x4xf32>, vector<4x1xf32>, vector<32x1xf32> -> vector<32x1xf32>
    %18 = arith.negf %17 : vector<32x1xf32>
    %19 = math.exp %18 : vector<32x1xf32>
    %cst_11 = arith.constant 1.000000e+00 : f32
    %20 = vector.broadcast %cst_11 : f32 to vector<32x1xf32>
    %21 = arith.addf %20, %19 : vector<32x1xf32>
    %22 = arith.divf %20, %21 : vector<32x1xf32>
    %23 = vector.broadcast %22 : vector<32x1xf32> to vector<32x256xf32>
    %24 = arith.mulf %23, %7 : vector<32x256xf32>
    %25 = arith.index_cast %5 : i32 to index
    %c0_12 = arith.constant 0 : index
    %26 = vector.load %arg6[%25, %c0_12] : memref<64x256xf32, #tpu.memory_space<vmem>>, vector<32x256xf32>
    tpu.vector_store %arg6[%25, %c0_12], %24 {strides = array<i32>} : memref<64x256xf32, #tpu.memory_space<vmem>>, vector<32x256xf32>,
    %c1_i32 = arith.constant 1 : i32
    %c32_i32_13 = arith.constant 32 : i32
    %27 = arith.muli %c1_i32, %c32_i32_13 : i32
    %28 = tpu.assume_multiple %27, 32 : i32
    %29 = arith.index_cast %28 : i32 to index
    %c0_14 = arith.constant 0 : index
    %30 = vector.load %arg1[%29, %c0_14] : memref<64x256xf32, #tpu.memory_space<vmem>>, vector<32x256xf32>
    %31 = arith.mulf %30, %0 : vector<32x256xf32>
    %cst_15 = arith.constant dense<0.000000e+00> : vector<32xf32>
    %32 = vector.multi_reduction <add>, %31, %cst_15 [1] : vector<32x256xf32> to vector<32xf32>
    %33 = vector.shape_cast %32 : vector<32xf32> to vector<32x1xf32>
    %cst_16 = arith.constant dense<0.000000e+00> : vector<4x1xf32>
    %34 = tpu.matmul %1, %33, %cst_16 {dimension_numbers = #tpu.dot_dimension_numbers<[1], [0], [0], [1], [0, 0, 1, 1], [], []>} : vector<4x32xf32>, vector<32x1xf32>, vector<4x1xf32> -> vector<4x1xf32>
    %cst_17 = arith.constant 0.000000e+00 : f32
    %35 = vector.broadcast %cst_17 : f32 to vector<4x1xf32>
    %36 = arith.cmpf oge, %34, %35 : vector<4x1xf32>
    %37 = vector.broadcast %3 : f32 to vector<4x1xf32>
    %38 = arith.mulf %37, %34 : vector<4x1xf32>
    %39 = arith.select %36, %34, %38 : vector<4x1xi1>, vector<4x1xf32>
    %cst_18 = arith.constant dense<0.000000e+00> : vector<32x1xf32>
    %40 = tpu.matmul %2, %39, %cst_18 {dimension_numbers = #tpu.dot_dimension_numbers<[1], [0], [0], [1], [0, 0, 1, 1], [], []>} : vector<32x4xf32>, vector<4x1xf32>, vector<32x1xf32> -> vector<32x1xf32>
    %41 = arith.negf %40 : vector<32x1xf32>
    %42 = math.exp %41 : vector<32x1xf32>
    %cst_19 = arith.constant 1.000000e+00 : f32
    %43 = vector.broadcast %cst_19 : f32 to vector<32x1xf32>
    %44 = arith.addf %43, %42 : vector<32x1xf32>
    %45 = arith.divf %43, %44 : vector<32x1xf32>
    %46 = vector.broadcast %45 : vector<32x1xf32> to vector<32x256xf32>
    %47 = arith.mulf %46, %30 : vector<32x256xf32>
    %48 = arith.index_cast %28 : i32 to index
    %c0_20 = arith.constant 0 : index
    %49 = vector.load %arg6[%48, %c0_20] : memref<64x256xf32, #tpu.memory_space<vmem>>, vector<32x256xf32>
    tpu.vector_store %arg6[%48, %c0_20], %47 {strides = array<i32>} : memref<64x256xf32, #tpu.memory_space<vmem>>, vector<32x256xf32>,
    %c2_i32 = arith.constant 2 : i32
    return
  }
  func.func @transform_0(%arg0: i32) -> (i32, i32) {
    %c0_i32 = arith.constant 0 : i32
    %c0_i32_0 = arith.constant 0 : i32
    return %arg0, %c0_i32 : i32, i32
  }
  func.func @transform_1(%arg0: i32) -> (i32, i32) {
    %c0_i32 = arith.constant 0 : i32
    %c0_i32_0 = arith.constant 0 : i32
    %c0_i32_1 = arith.constant 0 : i32
    return %c0_i32, %c0_i32_0 : i32, i32
  }
  func.func @transform_2(%arg0: i32) -> (i32, i32) {
    %c0_i32 = arith.constant 0 : i32
    %c0_i32_0 = arith.constant 0 : i32
    %c0_i32_1 = arith.constant 0 : i32
    return %c0_i32, %c0_i32_0 : i32, i32
  }
  func.func @transform_3(%arg0: i32) -> (i32, i32) {
    %c0_i32 = arith.constant 0 : i32
    %c0_i32_0 = arith.constant 0 : i32
    %c0_i32_1 = arith.constant 0 : i32
    return %c0_i32, %c0_i32_0 : i32, i32
  }
  func.func @transform_4(%arg0: i32) -> (i32, i32) {
    %c0_i32 = arith.constant 0 : i32
    %c0_i32_0 = arith.constant 0 : i32
    %c0_i32_1 = arith.constant 0 : i32
    return %c0_i32, %c0_i32_0 : i32, i32
  }
  func.func @transform_5(%arg0: i32) -> (i32, i32) {
    %c0_i32 = arith.constant 0 : i32
    %c0_i32_0 = arith.constant 0 : i32
    return %arg0, %c0_i32 : i32, i32
  }
}

</mosaic_0001>

<llo_original>
// kernel: pmca_forward.1
$region0: #{pmca_forward.1}
  #allocation0 [shape = 'u32[]', space=smem, size = 0x4, offset = 0x4, fixed_abs, tag = 'smem constant byte address 0x4 - core index']
  #allocation1 [shape = 'u32[144,128]{1,0:T(1,128)}', space=vmem, size = 0x12000, scoped, tag = 'internal scratch']
  #allocation2 [shape = 'f32[1,1]{1,0:T(1,128)S(6)}', space=smem, size = 0x200, scoped, tag = 'scoped memory for pmca_forward.1']
  %s0 = inlined_call_operand.vmem [shape: f32[64,256], index: 0, kind: input, shape index: {}]
  %s1 = inlined_call_operand.vmem [shape: f32[32,256], index: 1, kind: input, shape index: {}]
  %s2 = inlined_call_operand.vmem [shape: f32[4,32], index: 2, kind: input, shape index: {}]
  %s3 = inlined_call_operand.vmem [shape: f32[32,4], index: 3, kind: input, shape index: {}]
  %s4 = inlined_call_operand.<no memory space> [shape: f32[1,1], index: 4, kind: input, shape index: {}]
  %s5 = inlined_call_operand.vmem [shape: f32[64,256], index: 5, kind: output, shape index: {}]
  %s6 = sld [smem:[#allocation0]]
  $region30: #{pmca_forward.1} parent=0
    _
  %s8 = ssub.s32 1, %s6
  %s9 = scalar_select 0, %s8, %s6
  %10 = sst [smem:[#allocation2]] %s4
  // Predicated region
  $region2: #{pmca_forward.1} parent=0 // pred_check
    _
  $region3: #{pmca_forward.1} parent=0 // pred_check_branch
    %12 = sbr.rel (0) target = $region5
  $region4: #{pmca_forward.1} parent=0 // pred_region
    _
  $region5: #{pmca_forward.1} parent=0 // pred_fallthru
    _
  // Predicated region
  $region6: #{pmca_forward.1} parent=0 // pred_check
    _
  $region7: #{pmca_forward.1} parent=0 // pred_check_branch
    %14 = sbr.rel (0) target = $region9
  $region8: #{pmca_forward.1} parent=0 // pred_region
    _
  $region9: #{pmca_forward.1} parent=0 // pred_fallthru
    _
  // Predicated region
  $region10: #{pmca_forward.1} parent=0 // pred_check
    _
  $region11: #{pmca_forward.1} parent=0 // pred_check_branch
    %16 = sbr.rel (0) target = $region13
  $region12: #{pmca_forward.1} parent=0 // pred_region
    _
  $region13: #{pmca_forward.1} parent=0 // pred_fallthru
    _
  // Predicated region
  $region14: #{pmca_forward.1} parent=0 // pred_check
    _
  $region15: #{pmca_forward.1} parent=0 // pred_check_branch
    %18 = sbr.rel (0) target = $region17
  $region16: #{pmca_forward.1} parent=0 // pred_region
    _
  $region17: #{pmca_forward.1} parent=0 // pred_fallthru
    _
  // Predicated region
  $region18: #{pmca_forward.1} parent=0 // pred_check
    _
  $region19: #{pmca_forward.1} parent=0 // pred_check_branch
    %20 = sbr.rel (0) target = $region21
  $region20: #{pmca_forward.1} parent=0 // pred_region
    _
  $region21: #{pmca_forward.1} parent=0 // pred_fallthru
    _
  %v21 = vld [vmem:[%s1] sm:$0xff]
  %v22 = vld [vmem:[%s1 + $0x8] sm:$0xff]
  %v23 = vld [vmem:[%s1 + $0x10] sm:$0xff]
  %v24 = vld [vmem:[%s1 + $0x18] sm:$0xff]
  %v25 = vld [vmem:[%s1 + $0x20] sm:$0xff]
  %v26 = vld [vmem:[%s1 + $0x28] sm:$0xff]
  %v27 = vld [vmem:[%s1 + $0x30] sm:$0xff]
  %v28 = vld [vmem:[%s1 + $0x38] sm:$0xff]
  %v29 = vld [vmem:[%s2] sm:$0xf]
  %v30 = vld [vmem:[%s3] sm:$0xff]
  %v31 = vld [vmem:[%s3 + $0x8] sm:$0xff]
  %v32 = vld [vmem:[%s3 + $0x10] sm:$0xff]
  %v33 = vld [vmem:[%s3 + $0x18] sm:$0xff]
  %s34 = sld [smem:[#allocation2]]
  %s35 = smul.u32 0, 2
  %s36 = smul.addr %s35, 8
  %s37 = scalar_lea.vmem %s0, %s36
  %v38 = vld [vmem:[%s37] sm:$0xff]
  %v39 = vld [vmem:[%s37 + $0x8] sm:$0xff]
  %v40 = vld [vmem:[%s37 + $0x10] sm:$0xff]
  %v41 = vld [vmem:[%s37 + $0x18] sm:$0xff]
  %v42 = vld [vmem:[%s37 + $0x20] sm:$0xff]
  %v43 = vld [vmem:[%s37 + $0x28] sm:$0xff]
  %v44 = vld [vmem:[%s37 + $0x30] sm:$0xff]
  %v45 = vld [vmem:[%s37 + $0x38] sm:$0xff]
  %v46 = vmul.f32 %v38, %v21
  %v47 = vmul.f32 %v39, %v22
  %v48 = vmul.f32 %v40, %v23
  %v49 = vmul.f32 %v41, %v24
  %v50 = vmul.f32 %v42, %v25
  %v51 = vmul.f32 %v43, %v26
  %v52 = vmul.f32 %v44, %v27
  %v53 = vmul.f32 %v45, %v28
  %v54 = vadd.f32 %v46, %v47
  %55 = vadd.xlane.f32.xlu0 %v54
  %v56 = vpop.xlane.xlu0 %55
  %v57 = vadd.f32 %v48, %v49
  %58 = vadd.xlane.f32.xlu0 %v57
  %v59 = vpop.xlane.xlu0 %58
  %v60 = vadd.f32 %v50, %v51
  %61 = vadd.xlane.f32.xlu0 %v60
  %v62 = vpop.xlane.xlu0 %61
  %v63 = vadd.f32 %v52, %v53
  %64 = vadd.xlane.f32.xlu0 %v63
  %v65 = vpop.xlane.xlu0 %64
  %vm66 = vcmask 261120
  %v68 = vsel %vm66, %v29, 0
  %70 = vmatprep.subr.mxu0 0.0
  %71 = vmatpush1.msra.mxu0 %v56
  %72 = vmatprep.subr.mxu0 0.0
  %73 = vmatpush1.msra.mxu0 %v59
  %74 = vmatprep.subr.mxu0 0.0
  %75 = vmatpush1.msra.mxu0 %v62
  %76 = vmatprep.subr.mxu0 0.0
  %77 = vmatpush1.msra.mxu0 %v65
  %78 = vmatprep.subr.mxu0 0.0
  %79 = vmatpush1.msra.mxu0 0.0
  %80 = vmatprep.subr.mxu0 0.0
  %81 = vmatpush1.msra.mxu0 0.0
  %82 = vmatprep.subr.mxu0 0.0
  %83 = vmatpush1.msra.mxu0 0.0
  %84 = vmatprep.subr.mxu0 0.0
  %85 = vmatpush1.msra.mxu0 0.0
  %86 = vmatprep.subr.mxu0 0.0
  %87 = vmatpush1.msra.mxu0 0.0
  %88 = vmatprep.subr.mxu0 0.0
  %89 = vmatpush1.msra.mxu0 0.0
  %90 = vmatprep.subr.mxu0 0.0
  %91 = vmatpush1.msra.mxu0 0.0
  %92 = vmatprep.subr.mxu0 0.0
  %93 = vmatpush1.msra.mxu0 0.0
  %94 = vmatprep.subr.mxu0 0.0
  %95 = vmatpush1.msra.mxu0 0.0
  %96 = vmatprep.subr.mxu0 0.0
  %97 = vmatpush1.msra.mxu0 0.0
  %98 = vmatprep.subr.mxu0 0.0
  %99 = vmatpush1.msra.mxu0 0.0
  %100 = vmatprep.subr.mxu0 0.0
  %101 = vmatpush1.msra.mxu0 0.0
  %102 = vmatprep.subr.mxu0 0.0
  %103 = vmatpush1.msra.mxu0 0.0
  %104 = vmatprep.subr.mxu0 0.0
  %105 = vmatpush1.msra.mxu0 0.0
  %106 = vmatprep.subr.mxu0 0.0
  %107 = vmatpush1.msra.mxu0 0.0
  %108 = vmatprep.subr.mxu0 0.0
  %109 = vmatpush1.msra.mxu0 0.0
  %110 = vmatprep.subr.mxu0 0.0
  %111 = vmatpush1.msra.mxu0 0.0
  %112 = vmatprep.subr.mxu0 0.0
  %113 = vmatpush1.msra.mxu0 0.0
  %114 = vmatprep.subr.mxu0 0.0
  %115 = vmatpush1.msra.mxu0 0.0
  %116 = vmatprep.subr.mxu0 0.0
  %117 = vmatpush1.msra.mxu0 0.0
  %118 = vmatprep.subr.mxu0 0.0
  %119 = vmatpush1.msra.mxu0 0.0
  %120 = vmatprep.subr.mxu0 0.0
  %121 = vmatpush1.msra.mxu0 0.0
  %122 = vmatprep.subr.mxu0 0.0
  %123 = vmatpush1.msra.mxu0 0.0
  %124 = vmatprep.subr.mxu0 0.0
  %125 = vmatpush1.msra.mxu0 0.0
  %126 = vmatprep.subr.mxu0 0.0
  %127 = vmatpush1.msra.mxu0 0.0
  %128 = vmatprep.subr.mxu0 0.0
  %129 = vmatpush1.msra.mxu0 0.0
  %130 = vmatprep.subr.mxu0 0.0
  %131 = vmatpush1.msra.mxu0 0.0
  %132 = vmatprep.subr.mxu0 0.0
  %133 = vmatpush1.msra.mxu0 0.0
  %134 = vmatprep.mubr.f32.mxu0 0.0
  %135 = vmatmul.mubr.f32.gmra.mrb[0].mxu0 %v68
  %v136 = vpop.f32.mrb[0].mxu0
  %v137 = vadd.f32 0.0, %v136
  %v138 = vpop.f32.mrb[0].mxu0
  %139 = vdwg.mxu0
  %vm140 = vcmp.ge.f32.partialorder %v137, 0.0
  %v141 = vstv %s34
  %v142 = vmul.f32 %v141, %v137
  %v143 = vsel %vm140, %v137, %v142
  %vm144 = vcmask 31744
  %v146 = vsel %vm144, %v30, 0
  %v149 = vsel %vm144, %v31, 0
  %v152 = vsel %vm144, %v32, 0
  %v155 = vsel %vm144, %v33, 0
  %vm157 = vcmask 1043456
  %v159 = vsel %vm157, %v143, 0
  %161 = vmatprep.subr.mxu0 0.0
  %162 = vmatpush1.msra.mxu0 %v159
  %163 = vmatprep.subr.mxu0 0.0
  %164 = vmatpush1.msra.mxu0 0.0
  %165 = vmatprep.subr.mxu0 0.0
  %166 = vmatpush1.msra.mxu0 0.0
  %167 = vmatprep.subr.mxu0 0.0
  %168 = vmatpush1.msra.mxu0 0.0
  %169 = vmatprep.subr.mxu0 0.0
  %170 = vmatpush1.msra.mxu0 0.0
  %171 = vmatprep.subr.mxu0 0.0
  %172 = vmatpush1.msra.mxu0 0.0
  %173 = vmatprep.subr.mxu0 0.0
  %174 = vmatpush1.msra.mxu0 0.0
  %175 = vmatprep.subr.mxu0 0.0
  %176 = vmatpush1.msra.mxu0 0.0
  %177 = vmatprep.subr.mxu0 0.0
  %178 = vmatpush1.msra.mxu0 0.0
  %179 = vmatprep.subr.mxu0 0.0
  %180 = vmatpush1.msra.mxu0 0.0
  %181 = vmatprep.subr.mxu0 0.0
  %182 = vmatpush1.msra.mxu0 0.0
  %183 = vmatprep.subr.mxu0 0.0
  %184 = vmatpush1.msra.mxu0 0.0
  %185 = vmatprep.subr.mxu0 0.0
  %186 = vmatpush1.msra.mxu0 0.0
  %187 = vmatprep.subr.mxu0 0.0
  %188 = vmatpush1.msra.mxu0 0.0
  %189 = vmatprep.subr.mxu0 0.0
  %190 = vmatpush1.msra.mxu0 0.0
  %191 = vmatprep.subr.mxu0 0.0
  %192 = vmatpush1.msra.mxu0 0.0
  %193 = vmatprep.subr.mxu0 0.0
  %194 = vmatpush1.msra.mxu0 0.0
  %195 = vmatprep.subr.mxu0 0.0
  %196 = vmatpush1.msra.mxu0 0.0
  %197 = vmatprep.subr.mxu0 0.0
  %198 = vmatpush1.msra.mxu0 0.0
  %199 = vmatprep.subr.mxu0 0.0
  %200 = vmatpush1.msra.mxu0 0.0
  %201 = vmatprep.subr.mxu0 0.0
  %202 = vmatpush1.msra.mxu0 0.0
  %203 = vmatprep.subr.mxu0 0.0
  %204 = vmatpush1.msra.mxu0 0.0
  %205 = vmatprep.subr.mxu0 0.0
  %206 = vmatpush1.msra.mxu0 0.0
  %207 = vmatprep.subr.mxu0 0.0
  %208 = vmatpush1.msra.mxu0 0.0
  %209 = vmatprep.subr.mxu0 0.0
  %210 = vmatpush1.msra.mxu0 0.0
  %211 = vmatprep.subr.mxu0 0.0
  %212 = vmatpush1.msra.mxu0 0.0
  %213 = vmatprep.subr.mxu0 0.0
  %214 = vmatpush1.msra.mxu0 0.0
  %215 = vmatprep.subr.mxu0 0.0
  %216 = vmatpush1.msra.mxu0 0.0
  %217 = vmatprep.subr.mxu0 0.0
  %218 = vmatpush1.msra.mxu0 0.0
  %219 = vmatprep.subr.mxu0 0.0
  %220 = vmatpush1.msra.mxu0 0.0
  %221 = vmatprep.subr.mxu0 0.0
  %222 = vmatpush1.msra.mxu0 0.0
  %223 = vmatprep.subr.mxu0 0.0
  %224 = vmatpush1.msra.mxu0 0.0
  %225 = vmatprep.mubr.f32.mxu0 0.0
  %226 = vmatmul.mubr.f32.gmra.mrb[0].mxu0 %v146
  %v227 = vpop.f32.mrb[0].mxu0
  %v228 = vadd.f32 0.0, %v227
  %v229 = vpop.f32.mrb[0].mxu0
  %230 = vmatprep.mubr.f32.mxu0 0.0
  %231 = vmatmul.mubr.f32.gmra.mrb[0].mxu0 %v149
  %v232 = vpop.f32.mrb[0].mxu0
  %v233 = vadd.f32 0.0, %v232
  %v234 = vpop.f32.mrb[0].mxu0
  %235 = vmatprep.mubr.f32.mxu0 0.0
  %236 = vmatmul.mubr.f32.gmra.mrb[0].mxu0 %v152
  %v237 = vpop.f32.mrb[0].mxu0
  %v238 = vadd.f32 0.0, %v237
  %v239 = vpop.f32.mrb[0].mxu0
  %240 = vmatprep.mubr.f32.mxu0 0.0
  %241 = vmatmul.mubr.f32.gmra.mrb[0].mxu0 %v155
  %v242 = vpop.f32.mrb[0].mxu0
  %v243 = vadd.f32 0.0, %v242
  %v244 = vpop.f32.mrb[0].mxu0
  %245 = vdwg.mxu0
  %v246 = vxor.u32 %v228, 2147483648
  %v247 = vxor.u32 %v233, 2147483648
  %v248 = vxor.u32 %v238, 2147483648
  %v249 = vxor.u32 %v243, 2147483648
  %v250 = vmul.f32 %v246, 1.442695
  %v251 = vpow.pop %v250
  %v252 = vmul.f32 %v247, 1.442695
  %v253 = vpow.pop %v252
  %v254 = vmul.f32 %v248, 1.442695
  %v255 = vpow.pop %v254
  %v256 = vmul.f32 %v249, 1.442695
  %v257 = vpow.pop %v256
  %v258 = vadd.f32 %v251, 1.0
  %v259 = vadd.f32 %v253, 1.0
  %v260 = vadd.f32 %v255, 1.0
  %v261 = vadd.f32 %v257, 1.0
  %v262 = vrcp.pop %v258
  %v263 = vmul.f32 1.0, %v262
  %v264 = vrcp.pop %v259
  %v265 = vmul.f32 1.0, %v264
  %v266 = vrcp.pop %v260
  %v267 = vmul.f32 1.0, %v266
  %v268 = vrcp.pop %v261
  %v269 = vmul.f32 1.0, %v268
  %271 = vset.pattern.permute.xlu0 0
  %272 = vperm.xlu0 %271, %v263
  %v273 = vpop.permute.xlu0 %272
  %276 = vset.pattern.permute.xlu0 0
  %277 = vperm.xlu0 %276, %v265
  %v278 = vpop.permute.xlu0 %277
  %281 = vset.pattern.permute.xlu0 0
  %282 = vperm.xlu0 %281, %v267
  %v283 = vpop.permute.xlu0 %282
  %286 = vset.pattern.permute.xlu0 0
  %287 = vperm.xlu0 %286, %v269
  %v288 = vpop.permute.xlu0 %287
  %v290 = vmul.f32 %v273, %v38
  %v291 = vmul.f32 %v273, %v39
  %v292 = vmul.f32 %v278, %v40
  %v293 = vmul.f32 %v278, %v41
  %v294 = vmul.f32 %v283, %v42
  %v295 = vmul.f32 %v283, %v43
  %v296 = vmul.f32 %v288, %v44
  %v297 = vmul.f32 %v288, %v45
  %s298 = smul.addr %s35, 8
  %s299 = scalar_lea.vmem %s5, %s298
  %300 = vst [vmem:[%s299] sm:$0xff] %v290
  %301 = vst [vmem:[%s299 + $0x8] sm:$0xff] %v291
  %302 = vst [vmem:[%s299 + $0x10] sm:$0xff] %v292
  %303 = vst [vmem:[%s299 + $0x18] sm:$0xff] %v293
  %304 = vst [vmem:[%s299 + $0x20] sm:$0xff] %v294
  %305 = vst [vmem:[%s299 + $0x28] sm:$0xff] %v295
  %306 = vst [vmem:[%s299 + $0x30] sm:$0xff] %v296
  %307 = vst [vmem:[%s299 + $0x38] sm:$0xff] %v297
  %s308 = smul.u32 4, 2
  %s309 = smul.addr %s308, 8
  %s310 = scalar_lea.vmem %s0, %s309
  %v311 = vld [vmem:[%s310] sm:$0xff]
  %v312 = vld [vmem:[%s310 + $0x8] sm:$0xff]
  %v313 = vld [vmem:[%s310 + $0x10] sm:$0xff]
  %v314 = vld [vmem:[%s310 + $0x18] sm:$0xff]
  %v315 = vld [vmem:[%s310 + $0x20] sm:$0xff]
  %v316 = vld [vmem:[%s310 + $0x28] sm:$0xff]
  %v317 = vld [vmem:[%s310 + $0x30] sm:$0xff]
  %v318 = vld [vmem:[%s310 + $0x38] sm:$0xff]
  %v319 = vmul.f32 %v311, %v21
  %v320 = vmul.f32 %v312, %v22
  %v321 = vmul.f32 %v313, %v23
  %v322 = vmul.f32 %v314, %v24
  %v323 = vmul.f32 %v315, %v25
  %v324 = vmul.f32 %v316, %v26
  %v325 = vmul.f32 %v317, %v27
  %v326 = vmul.f32 %v318, %v28
  %v327 = vadd.f32 %v319, %v320
  %328 = vadd.xlane.f32.xlu0 %v327
  %v329 = vpop.xlane.xlu0 %328
  %v330 = vadd.f32 %v321, %v322
  %331 = vadd.xlane.f32.xlu0 %v330
  %v332 = vpop.xlane.xlu0 %331
  %v333 = vadd.f32 %v323, %v324
  %334 = vadd.xlane.f32.xlu0 %v333
  %v335 = vpop.xlane.xlu0 %334
  %v336 = vadd.f32 %v325, %v326
  %337 = vadd.xlane.f32.xlu0 %v336
  %v338 = vpop.xlane.xlu0 %337
  %339 = vmatprep.subr.mxu0 0.0
  %340 = vmatpush1.msra.mxu0 %v329
  %341 = vmatprep.subr.mxu0 0.0
  %342 = vmatpush1.msra.mxu0 %v332
  %343 = vmatprep.subr.mxu0 0.0
  %344 = vmatpush1.msra.mxu0 %v335
  %345 = vmatprep.subr.mxu0 0.0
  %346 = vmatpush1.msra.mxu0 %v338
  %347 = vmatprep.subr.mxu0 0.0
  %348 = vmatpush1.msra.mxu0 0.0
  %349 = vmatprep.subr.mxu0 0.0
  %350 = vmatpush1.msra.mxu0 0.0
  %351 = vmatprep.subr.mxu0 0.0
  %352 = vmatpush1.msra.mxu0 0.0
  %353 = vmatprep.subr.mxu0 0.0
  %354 = vmatpush1.msra.mxu0 0.0
  %355 = vmatprep.subr.mxu0 0.0
  %356 = vmatpush1.msra.mxu0 0.0
  %357 = vmatprep.subr.mxu0 0.0
  %358 = vmatpush1.msra.mxu0 0.0
  %359 = vmatprep.subr.mxu0 0.0
  %360 = vmatpush1.msra.mxu0 0.0
  %361 = vmatprep.subr.mxu0 0.0
  %362 = vmatpush1.msra.mxu0 0.0
  %363 = vmatprep.subr.mxu0 0.0
  %364 = vmatpush1.msra.mxu0 0.0
  %365 = vmatprep.subr.mxu0 0.0
  %366 = vmatpush1.msra.mxu0 0.0
  %367 = vmatprep.subr.mxu0 0.0
  %368 = vmatpush1.msra.mxu0 0.0
  %369 = vmatprep.subr.mxu0 0.0
  %370 = vmatpush1.msra.mxu0 0.0
  %371 = vmatprep.subr.mxu0 0.0
  %372 = vmatpush1.msra.mxu0 0.0
  %373 = vmatprep.subr.mxu0 0.0
  %374 = vmatpush1.msra.mxu0 0.0
  %375 = vmatprep.subr.mxu0 0.0
  %376 = vmatpush1.msra.mxu0 0.0
  %377 = vmatprep.subr.mxu0 0.0
  %378 = vmatpush1.msra.mxu0 0.0
  %379 = vmatprep.subr.mxu0 0.0
  %380 = vmatpush1.msra.mxu0 0.0
  %381 = vmatprep.subr.mxu0 0.0
  %382 = vmatpush1.msra.mxu0 0.0
  %383 = vmatprep.subr.mxu0 0.0
  %384 = vmatpush1.msra.mxu0 0.0
  %385 = vmatprep.subr.mxu0 0.0
  %386 = vmatpush1.msra.mxu0 0.0
  %387 = vmatprep.subr.mxu0 0.0
  %388 = vmatpush1.msra.mxu0 0.0
  %389 = vmatprep.subr.mxu0 0.0
  %390 = vmatpush1.msra.mxu0 0.0
  %391 = vmatprep.subr.mxu0 0.0
  %392 = vmatpush1.msra.mxu0 0.0
  %393 = vmatprep.subr.mxu0 0.0
  %394 = vmatpush1.msra.mxu0 0.0
  %395 = vmatprep.subr.mxu0 0.0
  %396 = vmatpush1.msra.mxu0 0.0
  %397 = vmatprep.subr.mxu0 0.0
  %398 = vmatpush1.msra.mxu0 0.0
  %399 = vmatprep.subr.mxu0 0.0
  %400 = vmatpush1.msra.mxu0 0.0
  %401 = vmatprep.subr.mxu0 0.0
  %402 = vmatpush1.msra.mxu0 0.0
  %403 = vmatprep.mubr.f32.mxu0 0.0
  %404 = vmatmul.mubr.f32.gmra.mrb[0].mxu0 %v68
  %v405 = vpop.f32.mrb[0].mxu0
  %v406 = vadd.f32 0.0, %v405
  %v407 = vpop.f32.mrb[0].mxu0
  %408 = vdwg.mxu0
  %vm409 = vcmp.ge.f32.partialorder %v406, 0.0
  %v410 = vmul.f32 %v141, %v406
  %v411 = vsel %vm409, %v406, %v410
  %v413 = vsel %vm157, %v411, 0
  %415 = vmatprep.subr.mxu0 0.0
  %416 = vmatpush1.msra.mxu0 %v413
  %417 = vmatprep.subr.mxu0 0.0
  %418 = vmatpush1.msra.mxu0 0.0
  %419 = vmatprep.subr.mxu0 0.0
  %420 = vmatpush1.msra.mxu0 0.0
  %421 = vmatprep.subr.mxu0 0.0
  %422 = vmatpush1.msra.mxu0 0.0
  %423 = vmatprep.subr.mxu0 0.0
  %424 = vmatpush1.msra.mxu0 0.0
  %425 = vmatprep.subr.mxu0 0.0
  %426 = vmatpush1.msra.mxu0 0.0
  %427 = vmatprep.subr.mxu0 0.0
  %428 = vmatpush1.msra.mxu0 0.0
  %429 = vmatprep.subr.mxu0 0.0
  %430 = vmatpush1.msra.mxu0 0.0
  %431 = vmatprep.subr.mxu0 0.0
  %432 = vmatpush1.msra.mxu0 0.0
  %433 = vmatprep.subr.mxu0 0.0
  %434 = vmatpush1.msra.mxu0 0.0
  %435 = vmatprep.subr.mxu0 0.0
  %436 = vmatpush1.msra.mxu0 0.0
  %437 = vmatprep.subr.mxu0 0.0
  %438 = vmatpush1.msra.mxu0 0.0
  %439 = vmatprep.subr.mxu0 0.0
  %440 = vmatpush1.msra.mxu0 0.0
  %441 = vmatprep.subr.mxu0 0.0
  %442 = vmatpush1.msra.mxu0 0.0
  %443 = vmatprep.subr.mxu0 0.0
  %444 = vmatpush1.msra.mxu0 0.0
  %445 = vmatprep.subr.mxu0 0.0
  %446 = vmatpush1.msra.mxu0 0.0
  %447 = vmatprep.subr.mxu0 0.0
  %448 = vmatpush1.msra.mxu0 0.0
  %449 = vmatprep.subr.mxu0 0.0
  %450 = vmatpush1.msra.mxu0 0.0
  %451 = vmatprep.subr.mxu0 0.0
  %452 = vmatpush1.msra.mxu0 0.0
  %453 = vmatprep.subr.mxu0 0.0
  %454 = vmatpush1.msra.mxu0 0.0
  %455 = vmatprep.subr.mxu0 0.0
  %456 = vmatpush1.msra.mxu0 0.0
  %457 = vmatprep.subr.mxu0 0.0
  %458 = vmatpush1.msra.mxu0 0.0
  %459 = vmatprep.subr.mxu0 0.0
  %460 = vmatpush1.msra.mxu0 0.0
  %461 = vmatprep.subr.mxu0 0.0
  %462 = vmatpush1.msra.mxu0 0.0
  %463 = vmatprep.subr.mxu0 0.0
  %464 = vmatpush1.msra.mxu0 0.0
  %465 = vmatprep.subr.mxu0 0.0
  %466 = vmatpush1.msra.mxu0 0.0
  %467 = vmatprep.subr.mxu0 0.0
  %468 = vmatpush1.msra.mxu0 0.0
  %469 = vmatprep.subr.mxu0 0.0
  %470 = vmatpush1.msra.mxu0 0.0
  %471 = vmatprep.subr.mxu0 0.0
  %472 = vmatpush1.msra.mxu0 0.0
  %473 = vmatprep.subr.mxu0 0.0
  %474 = vmatpush1.msra.mxu0 0.0
  %475 = vmatprep.subr.mxu0 0.0
  %476 = vmatpush1.msra.mxu0 0.0
  %477 = vmatprep.subr.mxu0 0.0
  %478 = vmatpush1.msra.mxu0 0.0
  %479 = vmatprep.mubr.f32.mxu0 0.0
  %480 = vmatmul.mubr.f32.gmra.mrb[0].mxu0 %v146
  %v481 = vpop.f32.mrb[0].mxu0
  %v482 = vadd.f32 0.0, %v481
  %v483 = vpop.f32.mrb[0].mxu0
  %484 = vmatprep.mubr.f32.mxu0 0.0
  %485 = vmatmul.mubr.f32.gmra.mrb[0].mxu0 %v149
  %v486 = vpop.f32.mrb[0].mxu0
  %v487 = vadd.f32 0.0, %v486
  %v488 = vpop.f32.mrb[0].mxu0
  %489 = vmatprep.mubr.f32.mxu0 0.0
  %490 = vmatmul.mubr.f32.gmra.mrb[0].mxu0 %v152
  %v491 = vpop.f32.mrb[0].mxu0
  %v492 = vadd.f32 0.0, %v491
  %v493 = vpop.f32.mrb[0].mxu0
  %494 = vmatprep.mubr.f32.mxu0 0.0
  %495 = vmatmul.mubr.f32.gmra.mrb[0].mxu0 %v155
  %v496 = vpop.f32.mrb[0].mxu0
  %v497 = vadd.f32 0.0, %v496
  %v498 = vpop.f32.mrb[0].mxu0
  %499 = vdwg.mxu0
  %v500 = vxor.u32 %v482, 2147483648
  %v501 = vxor.u32 %v487, 2147483648
  %v502 = vxor.u32 %v492, 2147483648
  %v503 = vxor.u32 %v497, 2147483648
  %v504 = vmul.f32 %v500, 1.442695
  %v505 = vpow.pop %v504
  %v506 = vmul.f32 %v501, 1.442695
  %v507 = vpow.pop %v506
  %v508 = vmul.f32 %v502, 1.442695
  %v509 = vpow.pop %v508
  %v510 = vmul.f32 %v503, 1.442695
  %v511 = vpow.pop %v510
  %v512 = vadd.f32 %v505, 1.0
  %v513 = vadd.f32 %v507, 1.0
  %v514 = vadd.f32 %v509, 1.0
  %v515 = vadd.f32 %v511, 1.0
  %v516 = vrcp.pop %v512
  %v517 = vmul.f32 1.0, %v516
  %v518 = vrcp.pop %v513
  %v519 = vmul.f32 1.0, %v518
  %v520 = vrcp.pop %v514
  %v521 = vmul.f32 1.0, %v520
  %v522 = vrcp.pop %v515
  %v523 = vmul.f32 1.0, %v522
  %525 = vset.pattern.permute.xlu0 0
  %526 = vperm.xlu0 %525, %v517
  %v527 = vpop.permute.xlu0 %526
  %530 = vset.pattern.permute.xlu0 0
  %531 = vperm.xlu0 %530, %v519
  %v532 = vpop.permute.xlu0 %531
  %535 = vset.pattern.permute.xlu0 0
  %536 = vperm.xlu0 %535, %v521
  %v537 = vpop.permute.xlu0 %536
  %540 = vset.pattern.permute.xlu0 0
  %541 = vperm.xlu0 %540, %v523
  %v542 = vpop.permute.xlu0 %541
  %v544 = vmul.f32 %v527, %v311
  %v545 = vmul.f32 %v527, %v312
  %v546 = vmul.f32 %v532, %v313
  %v547 = vmul.f32 %v532, %v314
  %v548 = vmul.f32 %v537, %v315
  %v549 = vmul.f32 %v537, %v316
  %v550 = vmul.f32 %v542, %v317
  %v551 = vmul.f32 %v542, %v318
  %s552 = smul.addr %s308, 8
  %s553 = scalar_lea.vmem %s5, %s552
  %554 = vst [vmem:[%s553] sm:$0xff] %v544
  %555 = vst [vmem:[%s553 + $0x8] sm:$0xff] %v545
  %556 = vst [vmem:[%s553 + $0x10] sm:$0xff] %v546
  %557 = vst [vmem:[%s553 + $0x18] sm:$0xff] %v547
  %558 = vst [vmem:[%s553 + $0x20] sm:$0xff] %v548
  %559 = vst [vmem:[%s553 + $0x28] sm:$0xff] %v549
  %560 = vst [vmem:[%s553 + $0x30] sm:$0xff] %v550
  %561 = vst [vmem:[%s553 + $0x38] sm:$0xff] %v551
  // Predicated region
  $region22: #{pmca_forward.1} parent=0 // pred_check
    _
  $region23: #{pmca_forward.1} parent=0 // pred_check_branch
    %563 = sbr.rel (0) target = $region25
  $region24: #{pmca_forward.1} parent=0 // pred_region
    _
  $region25: #{pmca_forward.1} parent=0 // pred_fallthru
    _
  // Predicated region
  $region26: #{pmca_forward.1} parent=0 // pred_check
    _
  $region27: #{pmca_forward.1} parent=0 // pred_check_branch
    %565 = sbr.rel (0) target = $region29
  $region28: #{pmca_forward.1} parent=0 // pred_region
    _
  $region29: #{pmca_forward.1} parent=0 // pred_fallthru
    _

</llo_original>
